<compile_context>
chip_gen: v7x
topology: tpu7x:2x2x1
jax: 0.10.0
libtpu: 0.0.40
codegen_flags: <defaults>
</compile_context>

<pallas_src>
import functools

import jax
import jax.numpy as jnp
from jax.experimental import pallas as pl
from jax.experimental.pallas import tpu as pltpu

LANE = 128
_VMEM_LIMIT = 48 * 1024 * 1024          # fits under v7x's 64 MiB physical VMEM
_HS_RESIDENT_BYTES = 12 * 1024 * 1024   # double-buffered resident Hs <= 24 MiB


def _round_up(x, m):
    return (x + m - 1) // m * m


# ----------------------------------------------------------------------------
# Kernel
# ----------------------------------------------------------------------------
def _gcn_layer_kernel(a_ref, hs_ref, dr_ref, w_ref, b_ref, out_ref, acc_ref, *,
                      tk, hs_resident, scale_out):
    """One GCNConv layer + ReLU with fused symmetric normalization.

    acc(i) = sum_k (A+I)[i, k-tile] @ Hs[k-tile]     (int8 A -> bf16 on MXU)
    out(i) = relu((d^-1/2[i] * acc(i)) @ W + b)      [* d^-1/2[i] if scale_out]
    where Hs = d^-1/2 * H (pre-scaled by the previous layer / wrapper).
    """
    k = pl.program_id(1)

    @pl.when(k == 0)
    def _init():
        acc_ref[...] = jnp.zeros_like(acc_ref)

    if hs_resident:
        start = pl.multiple_of(k * tk, tk)
        hs_blk = hs_ref[pl.ds(start, tk), :]      # slice the resident Hs
    else:
        hs_blk = hs_ref[...]                      # streamed (TK, C) block

    # int8 -> bf16 cast is VPU filler in a DMA-bound kernel; f32 accumulation.
    a_blk = a_ref[...].astype(jnp.bfloat16)
    acc_ref[...] += jnp.dot(a_blk, hs_blk, preferred_element_type=jnp.float32)

    @pl.when(k == pl.num_programs(1) - 1)
    def _finalize():
        dr = dr_ref[...]                          # (TM, 1) f32
        agg = acc_ref[...] * dr                   # D^-1/2 (A+I) D^-1/2 H
        h = jnp.dot(agg.astype(jnp.bfloat16), w_ref[...],
                    preferred_element_type=jnp.float32) + b_ref[...]
        h = jnp.maximum(h, 0.0)                   # bias + ReLU
        if scale_out:
            h = h * dr                            # pre-scale for next layer
        out_ref[...] = h.astype(out_ref.dtype)


# ----------------------------------------------------------------------------
# Wrappers
# ----------------------------------------------------------------------------
def _gcn_layer(adj, hs, dr, w, b, *, tm, tk, scale_out, out_dtype):
    n_pad = adj.shape[0]
    c_in_p = hs.shape[1]
    c_out_p = w.shape[1]

    # Keep Hs fully VMEM-resident when it fits the budget (x2 for buffering).
    hs_resident = 2 * n_pad * c_in_p * hs.dtype.itemsize <= _HS_RESIDENT_BYTES
    if hs_resident:
        hs_spec = pl.BlockSpec((n_pad, c_in_p), lambda i, k: (0, 0))
    else:
        hs_spec = pl.BlockSpec((tk, c_in_p), lambda i, k: (k, 0))

    kernel = functools.partial(_gcn_layer_kernel, tk=tk,
                               hs_resident=hs_resident, scale_out=scale_out)
    return pl.pallas_call(
        kernel,
        out_shape=jax.ShapeDtypeStruct((n_pad, c_out_p), out_dtype),
        grid=(n_pad // tm, n_pad // tk),
        in_specs=[
            pl.BlockSpec((tm, tk), lambda i, k: (i, k)),           # A (int8)
            hs_spec,                                               # d^-1/2 * H (bf16)
            pl.BlockSpec((tm, 1), lambda i, k: (i, 0)),            # d^-1/2 rows
            pl.BlockSpec((c_in_p, c_out_p), lambda i, k: (0, 0)),  # W (bf16, resident)
            pl.BlockSpec((1, c_out_p), lambda i, k: (0, 0)),       # b (f32, resident)
        ],
        out_specs=pl.BlockSpec((tm, c_out_p), lambda i, k: (i, 0)),
        scratch_shapes=[pltpu.VMEM((tm, c_in_p), jnp.float32)],    # f32 accumulator
        compiler_params=pltpu.CompilerParams(
            dimension_semantics=("parallel", "arbitrary"),
            vmem_limit_bytes=_VMEM_LIMIT),
    )(adj, hs, dr, w, b)


def init_params(key, in_channels, hidden_channels, out_channels):
    """Deterministic glorot-style init for the three GCNConv layers."""
    ks = jax.random.split(key, 3)

    def glorot(k, fan_in, fan_out):
        s = jnp.sqrt(6.0 / (fan_in + fan_out))
        return jax.random.uniform(k, (fan_in, fan_out), jnp.float32, -s, s)

    return {
        "w1": glorot(ks[0], in_channels, hidden_channels),
        "b1": jnp.zeros((hidden_channels,), jnp.float32),
        "w2": glorot(ks[1], hidden_channels, hidden_channels),
        "b2": jnp.zeros((hidden_channels,), jnp.float32),
        "w3": glorot(ks[2], hidden_channels, out_channels),
        "b3": jnp.zeros((out_channels,), jnp.float32),
    }


def edge_index_to_dense_adj(edge_index, n_pad):
    """Equivalent of Net.edgeIndex + densification (both edge directions),
    with the GCN self-loops baked into the diagonal (int8 0/1)."""
    src, dst = edge_index[0], edge_index[1]
    diag = jnp.arange(n_pad)
    adj = jnp.zeros((n_pad, n_pad), jnp.int8)
    adj = adj.at[diag, diag].set(1)            # self-loops
    adj = adj.at[src, dst].set(1)
    adj = adj.at[dst, src].set(1)
    return adj


def net_forward(x, edge_index, params, *, tm=256, tk=1024):
    """Forward of `Net` up to (and including) conv3 + ReLU.

    `to_dense_batch` with a single graph -> [1, N, C] + all-True mask; the
    model squeezes batch dim 0 before pooling, so x stays [N, C].
    Assumes edge_index has no pre-existing self-loops and no duplicate edges
    (as produced by the original model's edgeIndex()).
    """
    n, c_in = x.shape
    c_hid = params["w1"].shape[1]
    c_out = params["w3"].shape[1]

    # --- tile / padding bookkeeping (TM, TK multiples of 128, TK of TM) -----
    n128 = _round_up(n, LANE)
    tm = max(LANE, min(_round_up(tm, LANE), n128))
    n_pad = _round_up(n, tm)
    tk = max(tm, min(_round_up(tk, LANE), n_pad))
    tk = (tk // tm) * tm
    n_pad = _round_up(n_pad, tk)

    c_in_p = _round_up(c_in, LANE)
    c_hid_p = _round_up(c_hid, LANE)
    c_out_p = _round_up(c_out, LANE)

    # Dense int8 adjacency with baked self-loops. Padded rows never touch real
    # rows (A[real, pad] == 0), so padding is harmless.
    adj = edge_index_to_dense_adj(edge_index, n_pad)

    # O(E) degree (self-loop included) + rsqrt, in plain JAX (no N^2 pass).
    src, dst = edge_index[0], edge_index[1]
    deg = jnp.ones((n_pad,), jnp.float32)            # the baked self-loop
    deg = deg.at[src].add(1.0).at[dst].add(1.0)
    dr = jax.lax.rsqrt(deg).reshape(n_pad, 1)

    # Pre-scaled layer-1 input (cheap O(N*C) op in plain JAX).
    x_p = jnp.pad(x.astype(jnp.float32), ((0, n_pad - n), (0, c_in_p - c_in)))
    h0s = (x_p * dr).astype(jnp.bfloat16)

    def pad_w(w, r, c):
        return jnp.pad(w, ((0, r - w.shape[0]),
                           (0, c - w.shape[1]))).astype(jnp.bfloat16)

    def pad_b(b, c):
        return jnp.pad(b, (0, c - b.shape[0])).reshape(1, c).astype(jnp.float32)

    w1, b1 = pad_w(params["w1"], c_in_p, c_hid_p), pad_b(params["b1"], c_hid_p)
    w2, b2 = pad_w(params["w2"], c_hid_p, c_hid_p), pad_b(params["b2"], c_hid_p)
    w3, b3 = pad_w(params["w3"], c_hid_p, c_out_p), pad_b(params["b3"], c_out_p)

    h1s = _gcn_layer(adj, h0s, dr, w1, b1, tm=tm, tk=tk, scale_out=True,
                     out_dtype=jnp.bfloat16)
    h2s = _gcn_layer(adj, h1s, dr, w2, b2, tm=tm, tk=tk, scale_out=True,
                     out_dtype=jnp.bfloat16)
    h3 = _gcn_layer(adj, h2s, dr, w3, b3, tm=tm, tk=tk, scale_out=False,
                    out_dtype=jnp.float32)

    # TODO(synk): pool1/pool2/pool3 (NEWPooling6) not available in the source.
    return h3[:n, :c_out]


# ----------------------------------------------------------------------------
# Pure-JAX reference (dense GCN, f32) for validation
# ----------------------------------------------------------------------------
def _reference(x, edge_index, params):
    n = x.shape[0]
    adj = jnp.zeros((n, n), jnp.float32)
    adj = adj.at[edge_index[0], edge_index[1]].set(1.0)
    adj = adj.at[edge_index[1], edge_index[0]].set(1.0)
    a = adj + jnp.eye(n, dtype=jnp.float32)
    d = jax.lax.rsqrt(jnp.sum(a, axis=1, keepdims=True))
    a_hat = a * d * d.T
    h = x
    for l in ("1", "2", "3"):
        h = jnp.maximum(a_hat @ (h @ params["w" + l]) + params["b" + l], 0.0)
    return h


# ----------------------------------------------------------------------------
# Demo
# ----------------------------------------------------------------------------
if __name__ == "__main__":
    N_NODES = 300
    IN_C, HID_C, OUT_C = 8, 32, 16

    key = jax.random.PRNGKey(0)
    k_x, k_p = jax.random.split(key)

    # Node features [N, C_in]
    x = jax.random.normal(k_x, (N_NODES, IN_C), jnp.float32)

    # Deterministic graph: undirected ring + stride-7 chords (no duplicates,
    # no self-loops).
    idx = jnp.arange(N_NODES, dtype=jnp.int32)
    src = jnp.concatenate([idx, idx])
    dst = jnp.concatenate([(idx + 1) % N_NODES, (idx + 7) % N_NODES])
    edge_index = jnp.stack([src, dst], axis=0)   # [2, E]

    params = init_params(k_p, IN_C, HID_C, OUT_C)

    out = net_forward(x, edge_index, params, tm=128, tk=128)
    out = jax.block_until_ready(out)

    ref = _reference(x, edge_index, params)

    assert out.shape == (N_NODES, OUT_C)
    assert bool(jnp.all(jnp.isfinite(out)))
    assert bool(jnp.all(out >= 0.0))                      # ReLU output
    assert bool(jnp.allclose(out, ref, rtol=5e-2, atol=5e-2)), \
        float(jnp.max(jnp.abs(out - ref)))

    print("KERNEL_OK")
</pallas_src>

<mosaic_0001>
module attributes {stable_mosaic.version = 11 : i64} {
  func.func @_gcn_layer_kernel(%arg0: i32, %arg1: i32, %arg2: memref<128x128xi8, #tpu.memory_space<vmem>>, %arg3: memref<384x128xbf16, #tpu.memory_space<vmem>>, %arg4: memref<128x1xf32, #tpu.memory_space<vmem>>, %arg5: memref<128x128xbf16, #tpu.memory_space<vmem>>, %arg6: memref<1x128xf32, #tpu.memory_space<vmem>>, %arg7: memref<128x128xbf16, #tpu.memory_space<vmem>>, %arg8: memref<128x128xf32, #tpu.memory_space<vmem>>) attributes {dimension_semantics = [#tpu.dimension_semantics<parallel>, #tpu.dimension_semantics<arbitrary>], iteration_bounds = array<i64: 3, 3>, scalar_prefetch = 0 : i64, scratch_operands = 1 : i64, tpu.core_type = #tpu.core_type<tc>, window_params = [{transform_indices = @transform_0, window_bounds = array<i64: 128, 128>}, {pipeline_mode = #tpu.pipeline_mode<synchronous>, transform_indices = @transform_1, window_bounds = array<i64: 384, 128>}, {transform_indices = @transform_2, window_bounds = array<i64: 128, 1>}, {pipeline_mode = #tpu.pipeline_mode<synchronous>, transform_indices = @transform_3, window_bounds = array<i64: 128, 128>}, {pipeline_mode = #tpu.pipeline_mode<synchronous>, transform_indices = @transform_4, window_bounds = array<i64: 1, 128>}, {transform_indices = @transform_5, window_bounds = array<i64: 128, 128>}]} {
    %c0_i32 = arith.constant 0 : i32
    %0 = arith.cmpi eq, %arg1, %c0_i32 : i32
    %1 = arith.extui %0 : i1 to i32
    %c0_i32_0 = arith.constant 0 : i32
    %2 = arith.cmpi ne, %1, %c0_i32_0 : i32
    scf.if %2 {
      %cst_8 = arith.constant 0.000000e+00 : f32
      %16 = vector.broadcast %cst_8 : f32 to vector<128x128xf32>
      %c0_9 = arith.constant 0 : index
      %c0_10 = arith.constant 0 : index
      %17 = vector.load %arg8[%c0_9, %c0_10] : memref<128x128xf32, #tpu.memory_space<vmem>>, vector<128x128xf32>
      tpu.vector_store %arg8[%c0_9, %c0_10], %16 {strides = array<i32>} : memref<128x128xf32, #tpu.memory_space<vmem>>, vector<128x128xf32>,
    } else {
    }
    %c128_i32 = arith.constant 128 : i32
    %3 = arith.muli %arg1, %c128_i32 : i32
    %4 = tpu.assume_multiple %3, 128 : i32
    %5 = arith.index_cast %4 : i32 to index
    %c0 = arith.constant 0 : index
    %6 = vector.load %arg3[%5, %c0] : memref<384x128xbf16, #tpu.memory_space<vmem>>, vector<128x128xbf16>
    %c0_1 = arith.constant 0 : index
    %c0_2 = arith.constant 0 : index
    %7 = vector.load %arg2[%c0_1, %c0_2] : memref<128x128xi8, #tpu.memory_space<vmem>>, vector<128x128xi8>
    %8 = arith.sitofp %7 : vector<128x128xi8> to vector<128x128xbf16>
    %c0_3 = arith.constant 0 : index
    %c0_4 = arith.constant 0 : index
    %9 = vector.load %arg8[%c0_3, %c0_4] : memref<128x128xf32, #tpu.memory_space<vmem>>, vector<128x128xf32>
    %cst = arith.constant dense<0.000000e+00> : vector<128x128xf32>
    %10 = tpu.matmul %8, %6, %cst {dimension_numbers = #tpu.dot_dimension_numbers<[1], [0], [0], [1], [0, 0, 1, 1], [], []>} : vector<128x128xbf16>, vector<128x128xbf16>, vector<128x128xf32> -> vector<128x128xf32>
    %11 = arith.addf %9, %10 : vector<128x128xf32>
    %c0_5 = arith.constant 0 : index
    %c0_6 = arith.constant 0 : index
    %12 = vector.load %arg8[%c0_5, %c0_6] : memref<128x128xf32, #tpu.memory_space<vmem>>, vector<128x128xf32>
    tpu.vector_store %arg8[%c0_5, %c0_6], %11 {strides = array<i32>} : memref<128x128xf32, #tpu.memory_space<vmem>>, vector<128x128xf32>,
    %c2_i32 = arith.constant 2 : i32
    %13 = arith.cmpi eq, %arg1, %c2_i32 : i32
    %14 = arith.extui %13 : i1 to i32
    %c0_i32_7 = arith.constant 0 : i32
    %15 = arith.cmpi ne, %14, %c0_i32_7 : i32
    scf.if %15 {
      %c0_8 = arith.constant 0 : index
      %c0_9 = arith.constant 0 : index
      %16 = vector.load %arg4[%c0_8, %c0_9] : memref<128x1xf32, #tpu.memory_space<vmem>>, vector<128x1xf32>
      %c0_10 = arith.constant 0 : index
      %c0_11 = arith.constant 0 : index
      %17 = vector.load %arg8[%c0_10, %c0_11] : memref<128x128xf32, #tpu.memory_space<vmem>>, vector<128x128xf32>
      %18 = vector.broadcast %16 : vector<128x1xf32> to vector<128x128xf32>
      %19 = arith.mulf %17, %18 : vector<128x128xf32>
      %20 = arith.truncf %19 : vector<128x128xf32> to vector<128x128xbf16>
      %c0_12 = arith.constant 0 : index
      %c0_13 = arith.constant 0 : index
      %21 = vector.load %arg5[%c0_12, %c0_13] : memref<128x128xbf16, #tpu.memory_space<vmem>>, vector<128x128xbf16>
      %cst_14 = arith.constant dense<0.000000e+00> : vector<128x128xf32>
      %22 = tpu.matmul %20, %21, %cst_14 {dimension_numbers = #tpu.dot_dimension_numbers<[1], [0], [0], [1], [0, 0, 1, 1], [], []>} : vector<128x128xbf16>, vector<128x128xbf16>, vector<128x128xf32> -> vector<128x128xf32>
      %c0_15 = arith.constant 0 : index
      %c0_16 = arith.constant 0 : index
      %23 = vector.load %arg6[%c0_15, %c0_16] : memref<1x128xf32, #tpu.memory_space<vmem>>, vector<1x128xf32>
      %24 = vector.broadcast %23 : vector<1x128xf32> to vector<128x128xf32>
      %25 = arith.addf %22, %24 : vector<128x128xf32>
      %cst_17 = arith.constant 0.000000e+00 : f32
      %26 = vector.broadcast %cst_17 : f32 to vector<128x128xf32>
      %27 = arith.maximumf %25, %26 : vector<128x128xf32>
      %28 = vector.broadcast %16 : vector<128x1xf32> to vector<128x128xf32>
      %29 = arith.mulf %27, %28 : vector<128x128xf32>
      %30 = arith.truncf %29 : vector<128x128xf32> to vector<128x128xbf16>
      %c0_18 = arith.constant 0 : index
      %c0_19 = arith.constant 0 : index
      %31 = vector.load %arg7[%c0_18, %c0_19] : memref<128x128xbf16, #tpu.memory_space<vmem>>, vector<128x128xbf16>
      tpu.vector_store %arg7[%c0_18, %c0_19], %30 {strides = array<i32>} : memref<128x128xbf16, #tpu.memory_space<vmem>>, vector<128x128xbf16>,
    } else {
    }
    return
  }
  func.func @transform_0(%arg0: i32, %arg1: i32) -> (i32, i32) {
    %c0_i32 = arith.constant 0 : i32
    return %arg0, %arg1 : i32, i32
  }
  func.func @transform_1(%arg0: i32, %arg1: i32) -> (i32, i32) {
    %c0_i32 = arith.constant 0 : i32
    %c0_i32_0 = arith.constant 0 : i32
    %c0_i32_1 = arith.constant 0 : i32
    return %c0_i32, %c0_i32_0 : i32, i32
  }
  func.func @transform_2(%arg0: i32, %arg1: i32) -> (i32, i32) {
    %c0_i32 = arith.constant 0 : i32
    %c0_i32_0 = arith.constant 0 : i32
    return %arg0, %c0_i32 : i32, i32
  }
  func.func @transform_3(%arg0: i32, %arg1: i32) -> (i32, i32) {
    %c0_i32 = arith.constant 0 : i32
    %c0_i32_0 = arith.constant 0 : i32
    %c0_i32_1 = arith.constant 0 : i32
    return %c0_i32, %c0_i32_0 : i32, i32
  }
  func.func @transform_4(%arg0: i32, %arg1: i32) -> (i32, i32) {
    %c0_i32 = arith.constant 0 : i32
    %c0_i32_0 = arith.constant 0 : i32
    %c0_i32_1 = arith.constant 0 : i32
    return %c0_i32, %c0_i32_0 : i32, i32
  }
  func.func @transform_5(%arg0: i32, %arg1: i32) -> (i32, i32) {
    %c0_i32 = arith.constant 0 : i32
    %c0_i32_0 = arith.constant 0 : i32
    return %arg0, %c0_i32 : i32, i32
  }
}

</mosaic_0001>

<llo_original>
// kernel: tpu_custom_call.1
$region0: #{tpu_custom_call.1}
  #allocation0 [shape = 'u32[]', space=smem, size = 0x4, offset = 0x4, fixed_abs, tag = 'smem constant byte address 0x4 - core index']
  #allocation1 [shape = 'u32[144,128]{1,0:T(1,128)}', space=vmem, size = 0x12000, scoped, tag = 'internal scratch']
  #allocation2 [shape = 'f32[128,128]{1,0:T(8,128)}', space=vmem, size = 0x10000, scoped, tag = 'scratch operand']
  %s0 = inlined_call_operand.vmem [shape: s8[384,384], index: 0, kind: input, shape index: {}]
  %s1 = inlined_call_operand.hbm [shape: bf16[384,128], index: 1, kind: input, shape index: {}]
  %s2 = inlined_call_operand.vmem [shape: f32[384,1], index: 2, kind: input, shape index: {}]
  %s3 = inlined_call_operand.vmem [shape: bf16[128,128], index: 3, kind: input, shape index: {}]
  %s4 = inlined_call_operand.vmem [shape: f32[1,128], index: 4, kind: input, shape index: {}]
  %s5 = inlined_call_operand.hbm [shape: bf16[384,128], index: 5, kind: output, shape index: {}]
  %s6 = sld [smem:[#allocation0]]
  $region103: #{tpu_custom_call.1} parent=0
    _
  %s8 = ssub.s32 1, %s6
  %s9 = scalar_select 0, %s8, %s6
  $region1: #{tpu_custom_call.1} parent=0
    #allocation3 [shape = 'u8[32768]{0}', space=vmem, size = 0x8000, scoped, tag = 'input window, operand 0']
    #allocation4 [shape = 'u8[98304]{0}', space=vmem, size = 0x18000, scoped, tag = 'input window, operand 1, single buffered']
    #allocation5 [shape = 's32[2]{0}', space=sflag, size = 0x8, scoped, tag = 'scoped memory for tpu_custom_call.1']
    #allocation6 [shape = 's32[2]{0}', space=sflag, size = 0x8, scoped, tag = 'scoped memory for tpu_custom_call.1']
    #allocation7 [shape = 'u8[65536]{0}', space=vmem, size = 0x10000, scoped, tag = 'output window, operand 0']
    %10 = vsyncpa [#allocation5], 0
    %11 = vsyncpa [#allocation6], 0
    %s12 = scalar_lea.sflag [#allocation6], 1
    %13 = vsyncpa %s12, 0
    loop: start=0, step=1, limit=11
    $region2: #{tpu_custom_call.1} parent=1 // loop_pre_header
      _
    $region3: #{tpu_custom_call.1} parent=1 // loop_header
      %s15 = sphi 0, %s19
      %p16 = scmp.ge.s32.totalorder %s15, 11
      %s22 = sphi 0, %s34
      %s23 = sphi 0, %s30
      %s24 = sphi 0, %s22
      %s25 = sphi 0, %s23
      %s26 = sphi 0, %s24
      %s27 = sphi 0, %s25
      %s39 = sphi 0, %s41
      %s42 = sphi 0, %s39
      %s43 = sphi 0, %s42
      %s59 = sphi 0, %s43
      %s63 = sphi 0, %s63
      %s65 = sphi 0, %s63
      %s66 = sphi 0, %s65
      %s80 = sphi 0, %s66
      %s86 = sphi 0, %s88
      %s89 = sphi 0, %s86
      %s90 = sphi 0, %s89
      %s106 = sphi 0, %s90
      %s110 = sphi 0, %s110
      %s112 = sphi 0, %s110
      %s113 = sphi 0, %s112
      %s127 = sphi 0, %s113
      %s131 = sphi 0, %s131
      %s133 = sphi 0, %s131
      %s134 = sphi 0, %s133
      %s148 = sphi 0, %s134
      %s154 = sphi 0, %s156
      %s157 = sphi 0, %s154
      %s158 = sphi 0, %s157
      %s174 = sphi 0, %s158
    $region4: #{tpu_custom_call.1} parent=1 // loop_header_branch
      %18 = sbr.rel (%p16) target = $region8
    $region5: #{tpu_custom_call.1} parent=1 // loop_body
      %s20 = ssub.s32 %s15, 1
      %s21 = ssub.s32 %s15, 2
      %s28 = sadd.s32 1, %s23
      %p29 = scmp.ge.s32.totalorder %s28, 3
      %s30 = scalar_select %p29, 0, %s28
      %s31 = sadd.s32 1, %s22
      %s32 = scalar_select %p29, %s31, %s22
      %p33 = scmp.ge.s32.totalorder %s32, 3
      %s34 = scalar_select %p33, 0, %s32
      %s35 = ssub.s32 %s22, %s34
      %s36 = ssub.s32 %s23, %s30
      %s37 = sor.u32 %s35, %s36
      %p38 = scmp.eq.s32.totalorder %s37, 0
      %s40 = sadd.s32 %s39, 1
      %s41 = scalar_select %p38, %s39, %s40
      %p44 = pneg %p38
      %p45 = scmp.eq.s32.totalorder %s15, 8
      %p46 = por %p44, %p45
      %p47 = scmp.ne.s32.totalorder %s39, %s42
      %p48 = scmp.eq.s32.totalorder %s15, 0
      %p49 = por %p47, %p48
      %p50 = scmp.ne.s32.totalorder %s39, %s42
      %p51 = scmp.eq.s32.totalorder %s20, 8
      %p52 = por %p50, %p51
      %p53 = scmp.ne.s32.totalorder %s42, %s43
      %p54 = scmp.eq.s32.totalorder %s20, 0
      %p55 = por %p53, %p54
      %p56 = scmp.ne.s32.totalorder %s42, %s43
      %p57 = scmp.eq.s32.totalorder %s21, 8
      %p58 = por %p56, %p57
      %p60 = scmp.ne.s32.totalorder %s43, %s59
      %p61 = scmp.eq.s32.totalorder %s21, 0
      %p62 = por %p60, %p61
      %s64 = sadd.s32 %s63, 1
      %p67 = scmp.eq.s32.totalorder %s15, 8
      %p68 = scmp.ne.s32.totalorder %s63, %s65
      %p69 = scmp.eq.s32.totalorder %s15, 0
      %p70 = por %p68, %p69
      %p71 = scmp.ne.s32.totalorder %s63, %s65
      %p72 = scmp.eq.s32.totalorder %s20, 8
      %p73 = por %p71, %p72
      %p74 = scmp.ne.s32.totalorder %s65, %s66
      %p75 = scmp.eq.s32.totalorder %s20, 0
      %p76 = por %p74, %p75
      %p77 = scmp.ne.s32.totalorder %s65, %s66
      %p78 = scmp.eq.s32.totalorder %s21, 8
      %p79 = por %p77, %p78
      %p81 = scmp.ne.s32.totalorder %s66, %s80
      %p82 = scmp.eq.s32.totalorder %s21, 0
      %p83 = por %p81, %p82
      %s84 = ssub.s32 %s22, %s34
      %p85 = scmp.eq.s32.totalorder %s84, 0
      %s87 = sadd.s32 %s86, 1
      %s88 = scalar_select %p85, %s86, %s87
      %p91 = pneg %p85
      %p92 = scmp.eq.s32.totalorder %s15, 8
      %p93 = por %p91, %p92
      %p94 = scmp.ne.s32.totalorder %s86, %s89
      %p95 = scmp.eq.s32.totalorder %s15, 0
      %p96 = por %p94, %p95
      %p97 = scmp.ne.s32.totalorder %s86, %s89
      %p98 = scmp.eq.s32.totalorder %s20, 8
      %p99 = por %p97, %p98
      %p100 = scmp.ne.s32.totalorder %s89, %s90
      %p101 = scmp.eq.s32.totalorder %s20, 0
      %p102 = por %p100, %p101
      %p103 = scmp.ne.s32.totalorder %s89, %s90
      %p104 = scmp.eq.s32.totalorder %s21, 8
      %p105 = por %p103, %p104
      %p107 = scmp.ne.s32.totalorder %s90, %s106
      %p108 = scmp.eq.s32.totalorder %s21, 0
      %p109 = por %p107, %p108
      %s111 = sadd.s32 %s110, 1
      %p114 = scmp.eq.s32.totalorder %s15, 8
      %p115 = scmp.ne.s32.totalorder %s110, %s112
      %p116 = scmp.eq.s32.totalorder %s15, 0
      %p117 = por %p115, %p116
      %p118 = scmp.ne.s32.totalorder %s110, %s112
      %p119 = scmp.eq.s32.totalorder %s20, 8
      %p120 = por %p118, %p119
      %p121 = scmp.ne.s32.totalorder %s112, %s113
      %p122 = scmp.eq.s32.totalorder %s20, 0
      %p123 = por %p121, %p122
      %p124 = scmp.ne.s32.totalorder %s112, %s113
      %p125 = scmp.eq.s32.totalorder %s21, 8
      %p126 = por %p124, %p125
      %p128 = scmp.ne.s32.totalorder %s113, %s127
      %p129 = scmp.eq.s32.totalorder %s21, 0
      %p130 = por %p128, %p129
      %s132 = sadd.s32 %s131, 1
      %p135 = scmp.eq.s32.totalorder %s15, 8
      %p136 = scmp.ne.s32.totalorder %s131, %s133
      %p137 = scmp.eq.s32.totalorder %s15, 0
      %p138 = por %p136, %p137
      %p139 = scmp.ne.s32.totalorder %s131, %s133
      %p140 = scmp.eq.s32.totalorder %s20, 8
      %p141 = por %p139, %p140
      %p142 = scmp.ne.s32.totalorder %s133, %s134
      %p143 = scmp.eq.s32.totalorder %s20, 0
      %p144 = por %p142, %p143
      %p145 = scmp.ne.s32.totalorder %s133, %s134
      %p146 = scmp.eq.s32.totalorder %s21, 8
      %p147 = por %p145, %p146
      %p149 = scmp.ne.s32.totalorder %s134, %s148
      %p150 = scmp.eq.s32.totalorder %s21, 0
      %p151 = por %p149, %p150
      %s152 = ssub.s32 %s22, %s34
      %p153 = scmp.eq.s32.totalorder %s152, 0
      %s155 = sadd.s32 %s154, 1
      %s156 = scalar_select %p153, %s154, %s155
      %p159 = pneg %p153
      %p160 = scmp.eq.s32.totalorder %s15, 8
      %p161 = por %p159, %p160
      %p162 = scmp.ne.s32.totalorder %s154, %s157
      %p163 = scmp.eq.s32.totalorder %s15, 0
      %p164 = por %p162, %p163
      %p165 = scmp.ne.s32.totalorder %s154, %s157
      %p166 = scmp.eq.s32.totalorder %s20, 8
      %p167 = por %p165, %p166
      %p168 = scmp.ne.s32.totalorder %s157, %s158
      %p169 = scmp.eq.s32.totalorder %s20, 0
      %p170 = por %p168, %p169
      %p171 = scmp.ne.s32.totalorder %s157, %s158
      %p172 = scmp.eq.s32.totalorder %s21, 8
      %p173 = por %p171, %p172
      %p175 = scmp.ne.s32.totalorder %s158, %s174
      %p176 = scmp.eq.s32.totalorder %s21, 0
      %p177 = por %p175, %p176
      %p178 = scmp.le.s32.totalorder 1, %s15
      %p179 = scmp.lt.s32.totalorder %s15, 10
      %p180 = pnand %p178, %p179
      %p181 = pneg %p180
      // Predicated region
      $region9: #{tpu_custom_call.1} parent=5 // pred_check
        _
      $region10: #{tpu_custom_call.1} parent=5 // pred_check_branch
        %183 = sbr.rel (%p180) target = $region12
      $region11: #{tpu_custom_call.1} parent=5 // pred_region
        %s184 = ssub.s32 %s15, 1
        // Predicated region
        $region13: #{tpu_custom_call.1} parent=11 // pred_check
          %p185 = pneg %p76
        $region14: #{tpu_custom_call.1} parent=11 // pred_check_branch
          %187 = sbr.rel (%p185) target = $region16
        $region15: #{tpu_custom_call.1} parent=11 // pred_region
          %s189 = ssub.s32 3072, 3072
          %190 = vsyncadd [#allocation5], %s189
          %s191 = sshll.u32 [#allocation4], 4
          %s192 = int_to_ptr.vmem [resolvable:$true] %s191
          %197 = dma.hbm_to_vmem [thread:$0]  %s1, 3072, %s192, [#allocation5], 64, 64, 4
        $region16: #{tpu_custom_call.1} parent=11 // pred_fallthru
          _
        // Predicated region
        $region17: #{tpu_custom_call.1} parent=11 // pred_check
          %p198 = pneg %p123
        $region18: #{tpu_custom_call.1} parent=11 // pred_check_branch
          %200 = sbr.rel (%p198) target = $region20
        $region19: #{tpu_custom_call.1} parent=11 // pred_region
          _
        $region20: #{tpu_custom_call.1} parent=11 // pred_fallthru
          _
        // Predicated region
        $region21: #{tpu_custom_call.1} parent=11 // pred_check
          %p201 = pneg %p144
        $region22: #{tpu_custom_call.1} parent=11 // pred_check_branch
          %203 = sbr.rel (%p201) target = $region24
        $region23: #{tpu_custom_call.1} parent=11 // pred_region
          _
        $region24: #{tpu_custom_call.1} parent=11 // pred_fallthru
          _
      $region12: #{tpu_custom_call.1} parent=5 // pred_fallthru
        _
      %p204 = scmp.lt.s32.totalorder %s15, 9
      // Predicated region
      $region25: #{tpu_custom_call.1} parent=5 // pred_check
        %p205 = pneg %p204
      $region26: #{tpu_custom_call.1} parent=5 // pred_check_branch
        %207 = sbr.rel (%p205) target = $region28
      $region27: #{tpu_custom_call.1} parent=5 // pred_region
        // Predicated region
        $region29: #{tpu_custom_call.1} parent=27 // pred_check
          %p208 = pneg %p49
        $region30: #{tpu_custom_call.1} parent=27 // pred_check_branch
          %210 = sbr.rel (%p208) target = $region32
        $region31: #{tpu_custom_call.1} parent=27 // pred_region
          %s211 = sand.u32 %s39, 1
          %s212 = sand.u32 %s39, 1
          %s213 = smul.addr %s212, 32
          %s214 = scalar_lea.vmem [#allocation3], %s213
          %s215 = smul.u32 4, %s22
          %s216 = smul.addr %s215, 3
          %s217 = sadd.s32 %s23, %s216
          %s218 = smul.addr %s217, 8
          %s219 = scalar_lea.vmem %s0, %s218
          // Predicated region
          $region33: #{tpu_custom_call.1} parent=31 // pred_check
            _
          $region34: #{tpu_custom_call.1} parent=31 // pred_check_branch
            %221 = sbr.rel (0) target = $region36
          $region35: #{tpu_custom_call.1} parent=31 // pred_region
            // Predicated region
            $region37: #{tpu_custom_call.1} parent=35 // pred_check
              _
            $region38: #{tpu_custom_call.1} parent=35 // pred_check_branch
              %223 = sbr.rel (0) target = $region40
            $region39: #{tpu_custom_call.1} parent=35 // pred_region
              // Predicated region
              $region52: #{tpu_custom_call.1} parent=39 // pred_check
                _
              $region53: #{tpu_custom_call.1} parent=39 // pred_check_branch
                %244 = sbr.rel (0) target = $region55
              $region54: #{tpu_custom_call.1} parent=39 // pred_region
                loop: start=0, step=1, limit=1
                $region56: #{tpu_custom_call.1} parent=54 // loop_pre_header
                  _
                $region57: #{tpu_custom_call.1} parent=54 // loop_header
                  %s246 = sphi 0, %s250
                  %p247 = scmp.ge.s32.totalorder %s246, 1
                  %s251 = sphi %s219, %s219
                  %s252 = sphi %s214, %s214
                $region58: #{tpu_custom_call.1} parent=54 // loop_header_branch
                  %249 = sbr.rel (%p247) target = $region62
                $region59: #{tpu_custom_call.1} parent=54 // loop_body
                  %v253 = vld [vmem:[%s251] sm:$0xff]
                  %254 = vst [vmem:[%s252] sm:$0xff] %v253
                  %v255 = vld [vmem:[%s251 + $0x18] sm:$0xff]
                  %256 = vst [vmem:[%s252 + $0x8] sm:$0xff] %v255
                  %v257 = vld [vmem:[%s251 + $0x30] sm:$0xff]
                  %258 = vst [vmem:[%s252 + $0x10] sm:$0xff] %v257
                  %v259 = vld [vmem:[%s251 + $0x48] sm:$0xff]
                  %260 = vst [vmem:[%s252 + $0x18] sm:$0xff] %v259
                $region60: #{tpu_custom_call.1} parent=54 // loop_footer
                  %s250 = sadd.s32 1, %s246
                $region61: #{tpu_custom_call.1} parent=54 // loop_footer_branch
                  %245 = sbr.rel target = $region57
                $region62: #{tpu_custom_call.1} parent=54 // loop_exit
                  _
              $region55: #{tpu_custom_call.1} parent=39 // pred_fallthru
                _
              // Predicated region
              $region63: #{tpu_custom_call.1} parent=39 // pred_check
                _
              $region64: #{tpu_custom_call.1} parent=39 // pred_check_branch
                %262 = sbr.rel target = $region66
              $region65: #{tpu_custom_call.1} parent=39 // pred_region
                _
              $region66: #{tpu_custom_call.1} parent=39 // pred_fallthru
                _
            $region40: #{tpu_custom_call.1} parent=35 // pred_fallthru
              _
            // Predicated region
            $region41: #{tpu_custom_call.1} parent=35 // pred_check
              _
            $region42: #{tpu_custom_call.1} parent=35 // pred_check_branch
              %225 = sbr.rel target = $region44
            $region43: #{tpu_custom_call.1} parent=35 // pred_region
              loop: start=0, step=1, limit=1
              $region45: #{tpu_custom_call.1} parent=43 // loop_pre_header
                _
              $region46: #{tpu_custom_call.1} parent=43 // loop_header
                %s228 = sphi 0, %s232
                %p229 = scmp.ge.s32.totalorder %s228, 1
                %s233 = sphi %s219, %s219
                %s234 = sphi %s214, %s214
              $region47: #{tpu_custom_call.1} parent=43 // loop_header_branch
                %231 = sbr.rel (%p229) target = $region51
              $region48: #{tpu_custom_call.1} parent=43 // loop_body
                %v235 = vld [vmem:[%s233] sm:$0xff]
                %236 = vst [vmem:[%s234] sm:$0xff] %v235
                %v237 = vld [vmem:[%s233 + $0x18] sm:$0xff]
                %238 = vst [vmem:[%s234 + $0x8] sm:$0xff] %v237
                %v239 = vld [vmem:[%s233 + $0x30] sm:$0xff]
                %240 = vst [vmem:[%s234 + $0x10] sm:$0xff] %v239
                %v241 = vld [vmem:[%s233 + $0x48] sm:$0xff]
                %242 = vst [vmem:[%s234 + $0x18] sm:$0xff] %v241
              $region49: #{tpu_custom_call.1} parent=43 // loop_footer
                %s232 = sadd.s32 1, %s228
              $region50: #{tpu_custom_call.1} parent=43 // loop_footer_branch
                %227 = sbr.rel target = $region46
              $region51: #{tpu_custom_call.1} parent=43 // loop_exit
                _
            $region44: #{tpu_custom_call.1} parent=35 // pred_fallthru
              _
          $region36: #{tpu_custom_call.1} parent=31 // pred_fallthru
            _
          %263 = vnop
        $region32: #{tpu_custom_call.1} parent=27 // pred_fallthru
          _
        // Predicated region
        $region67: #{tpu_custom_call.1} parent=27 // pred_check
          %p264 = pneg %p96
        $region68: #{tpu_custom_call.1} parent=27 // pred_check_branch
          %266 = sbr.rel (%p264) target = $region70
        $region69: #{tpu_custom_call.1} parent=27 // pred_region
          %s267 = smul.u32 16, %s22
          %p268 = scmp.lt.s32.totalorder %s267, 47
          %s269 = scalar_select %p268, %s267, 47
          %s270 = smul.addr %s269, 8
          %s271 = scalar_lea.vmem %s2, %s270
          %s272 = smul.u32 16, %s22
        $region70: #{tpu_custom_call.1} parent=27 // pred_fallthru
          _
      $region28: #{tpu_custom_call.1} parent=5 // pred_fallthru
        _
      %p273 = scmp.le.s32.totalorder 1, %s15
      %p274 = scmp.lt.s32.totalorder %s15, 10
      %p275 = pnand %p273, %p274
      %p276 = pneg %p275
      // Predicated region
      $region71: #{tpu_custom_call.1} parent=5 // pred_check
        _
      $region72: #{tpu_custom_call.1} parent=5 // pred_check_branch
        %278 = sbr.rel (%p275) target = $region74
      $region73: #{tpu_custom_call.1} parent=5 // pred_region
        %s279 = ssub.s32 %s15, 1
        %s280 = sand.u32 %s42, 1
        %s281 = sand.u32 %s42, 1
        %s282 = smul.addr %s281, 32
        %s283 = scalar_lea.vmem [#allocation3], %s282
        // Predicated region
        $region75: #{tpu_custom_call.1} parent=73 // pred_check
          %p284 = pneg %p55
        $region76: #{tpu_custom_call.1} parent=73 // pred_check_branch
          %286 = sbr.rel (%p284) target = $region78
        $region77: #{tpu_custom_call.1} parent=73 // pred_region
          _
        $region78: #{tpu_custom_call.1} parent=73 // pred_fallthru
          _
        // Predicated region
        $region79: #{tpu_custom_call.1} parent=73 // pred_check
          %p287 = pneg %p76
        $region80: #{tpu_custom_call.1} parent=73 // pred_check_branch
          %289 = sbr.rel (%p287) target = $region82
        $region81: #{tpu_custom_call.1} parent=73 // pred_region
          %290 = dma.done [#allocation5], 3072
        $region82: #{tpu_custom_call.1} parent=73 // pred_fallthru
          _
        %s291 = sand.u32 %s42, 1
        %s292 = sand.u32 %s42, 1
        %s293 = smul.addr %s292, 32
        %s294 = scalar_lea.vmem [#allocation3], %s293
        %p295 = pneg %p55
        %p296 = pneg %p52
        %p297 = pneg %p76
        %p298 = pneg %p73
        %s299 = smul.u32 16, %s24
        %p300 = scmp.lt.s32.totalorder %s299, 47
        %s301 = scalar_select %p300, %s299, 47
        %s302 = smul.addr %s301, 8
        %s303 = scalar_lea.vmem %s2, %s302
        %p304 = pneg %p102
        %p305 = pneg %p99
        %p306 = pneg %p123
        %p307 = pneg %p120
        %p308 = pneg %p144
        %p309 = pneg %p141
        %p310 = pneg %p170
        %p311 = pneg %p167
        %s312 = sand.u32 %s157, 1
        %s313 = scalar_lea.sflag [#allocation6], %s312
        %s314 = sand.u32 %s157, 1
        %s315 = smul.addr %s314, 64
        %s316 = scalar_lea.vmem [#allocation7], %s315
        %s317 = smul.u32 4, %s24
        %s318 = smul.u32 16, %s24
        %p319 = scmp.lt.s32.totalorder %s318, 47
        %s320 = scalar_select %p319, %s318, 47
        %s321 = smul.addr %s320, 8
        %s322 = scalar_lea.vmem %s2, %s321
        %s323 = smul.u32 16, %s24
        %s324 = smul.u32 16, %s24
        %p326 = scmp.eq.s32.totalorder %s25, 0
        // Predicated region
        $region83: #{tpu_custom_call.1} parent=73 // pred_check
          %p327 = pneg %p326
        $region84: #{tpu_custom_call.1} parent=73 // pred_check_branch
          %329 = sbr.rel (%p327) target = $region86
        $region85: #{tpu_custom_call.1} parent=73 // pred_region
          %330 = vst [vmem:[#allocation2] sm:$0xff] 0.0
          %331 = vst [vmem:[#allocation2 + $0x8] sm:$0xff] 0.0
          %332 = vst [vmem:[#allocation2 + $0x10] sm:$0xff] 0.0
          %333 = vst [vmem:[#allocation2 + $0x18] sm:$0xff] 0.0
          %334 = vst [vmem:[#allocation2 + $0x20] sm:$0xff] 0.0
          %335 = vst [vmem:[#allocation2 + $0x28] sm:$0xff] 0.0
          %336 = vst [vmem:[#allocation2 + $0x30] sm:$0xff] 0.0
          %337 = vst [vmem:[#allocation2 + $0x38] sm:$0xff] 0.0
          %338 = vst [vmem:[#allocation2 + $0x40] sm:$0xff] 0.0
          %339 = vst [vmem:[#allocation2 + $0x48] sm:$0xff] 0.0
          %340 = vst [vmem:[#allocation2 + $0x50] sm:$0xff] 0.0
          %341 = vst [vmem:[#allocation2 + $0x58] sm:$0xff] 0.0
          %342 = vst [vmem:[#allocation2 + $0x60] sm:$0xff] 0.0
          %343 = vst [vmem:[#allocation2 + $0x68] sm:$0xff] 0.0
          %344 = vst [vmem:[#allocation2 + $0x70] sm:$0xff] 0.0
          %345 = vst [vmem:[#allocation2 + $0x78] sm:$0xff] 0.0
        $region86: #{tpu_custom_call.1} parent=73 // pred_fallthru
          _
        %s346 = smul.u32 %s25, 128
        %s347 = sshra.s32 %s346, 3
        %s348 = sand.u32 %s346, 7
        %s349 = smul.addr %s347, 4
        %s350 = scalar_lea.vmem [#allocation4], %s349
        %v351 = vld [vmem:[%s350] sm:$0xf]
        %v352 = vld [vmem:[%s350 + $0x4] sm:$0xf]
        %v353 = vld [vmem:[%s350 + $0x8] sm:$0xf]
        %v354 = vld [vmem:[%s350 + $0xc] sm:$0xf]
        %v355 = vld [vmem:[%s350 + $0x10] sm:$0xf]
        %v356 = vld [vmem:[%s350 + $0x14] sm:$0xf]
        %v357 = vld [vmem:[%s350 + $0x18] sm:$0xf]
        %v358 = vld [vmem:[%s350 + $0x1c] sm:$0xf]
        %v359 = vld [vmem:[%s350 + $0x20] sm:$0xf]
        %v360 = vld [vmem:[%s350 + $0x24] sm:$0xf]
        %v361 = vld [vmem:[%s350 + $0x28] sm:$0xf]
        %v362 = vld [vmem:[%s350 + $0x2c] sm:$0xf]
        %v363 = vld [vmem:[%s350 + $0x30] sm:$0xf]
        %v364 = vld [vmem:[%s350 + $0x34] sm:$0xf]
        %v365 = vld [vmem:[%s350 + $0x38] sm:$0xf]
        %v366 = vld [vmem:[%s350 + $0x3c] sm:$0xf]
        %v367 = vld [vmem:[%s283] sm:$0xff]
        %v368 = vld [vmem:[%s283 + $0x8] sm:$0xff]
        %v369 = vld [vmem:[%s283 + $0x10] sm:$0xff]
        %v370 = vld [vmem:[%s283 + $0x18] sm:$0xff]
        %v371 = vunpack.c.l.s8.bf16 %v367
        %v372 = vunpack.c.h.s8.bf16 %v367
        %v373 = vunpack.c.l.s8.bf16 %v368
        %v374 = vunpack.c.h.s8.bf16 %v368
        %v375 = vunpack.c.l.s8.bf16 %v369
        %v376 = vunpack.c.h.s8.bf16 %v369
        %v377 = vunpack.c.l.s8.bf16 %v370
        %v378 = vunpack.c.h.s8.bf16 %v370
        %v379 = vld [vmem:[#allocation2] sm:$0xff]
        %v380 = vld [vmem:[#allocation2 + $0x8] sm:$0xff]
        %v381 = vld [vmem:[#allocation2 + $0x10] sm:$0xff]
        %v382 = vld [vmem:[#allocation2 + $0x18] sm:$0xff]
        %v383 = vld [vmem:[#allocation2 + $0x20] sm:$0xff]
        %v384 = vld [vmem:[#allocation2 + $0x28] sm:$0xff]
        %v385 = vld [vmem:[#allocation2 + $0x30] sm:$0xff]
        %v386 = vld [vmem:[#allocation2 + $0x38] sm:$0xff]
        %v387 = vld [vmem:[#allocation2 + $0x40] sm:$0xff]
        %v388 = vld [vmem:[#allocation2 + $0x48] sm:$0xff]
        %v389 = vld [vmem:[#allocation2 + $0x50] sm:$0xff]
        %v390 = vld [vmem:[#allocation2 + $0x58] sm:$0xff]
        %v391 = vld [vmem:[#allocation2 + $0x60] sm:$0xff]
        %v392 = vld [vmem:[#allocation2 + $0x68] sm:$0xff]
        %v393 = vld [vmem:[#allocation2 + $0x70] sm:$0xff]
        %v394 = vld [vmem:[#allocation2 + $0x78] sm:$0xff]
        %v411 = vunpack.c.l.b16 %v351
        %v412 = vunpack.c.l.b16 %v352
        %v413 = vunpack.c.l.b16 %v353
        %v414 = vunpack.c.l.b16 %v354
        %v415 = vunpack.c.l.b16 %v355
        %v416 = vunpack.c.l.b16 %v356
        %v417 = vunpack.c.l.b16 %v357
        %v418 = vunpack.c.l.b16 %v358
        %v419 = vunpack.c.l.b16 %v359
        %v420 = vunpack.c.l.b16 %v360
        %v421 = vunpack.c.l.b16 %v361
        %v422 = vunpack.c.l.b16 %v362
        %v423 = vunpack.c.l.b16 %v363
        %v424 = vunpack.c.l.b16 %v364
        %v425 = vunpack.c.l.b16 %v365
        %v426 = vunpack.c.l.b16 %v366
        %v427 = vpack.c.b16 %v412, %v411
        %v428 = vpack.c.b16 %v414, %v413
        %v429 = vpack.c.b16 %v416, %v415
        %v430 = vpack.c.b16 %v418, %v417
        %v431 = vpack.c.b16 %v420, %v419
        %v432 = vpack.c.b16 %v422, %v421
        %v433 = vpack.c.b16 %v424, %v423
        %v434 = vpack.c.b16 %v426, %v425
        %443 = vmatprep.subr.bf16.mxu0 0
        %444 = vmatpush1.bf16.msra.mxu0 %v427
        %445 = vmatprep.subr.bf16.mxu0 0
        %446 = vmatpush1.bf16.msra.mxu0 %v428
        %447 = vmatprep.subr.bf16.mxu0 0
        %448 = vmatpush1.bf16.msra.mxu0 %v429
        %449 = vmatprep.subr.bf16.mxu0 0
        %450 = vmatpush1.bf16.msra.mxu0 %v430
        %451 = vmatprep.subr.bf16.mxu0 0
        %452 = vmatpush1.bf16.msra.mxu0 %v431
        %453 = vmatprep.subr.bf16.mxu0 0
        %454 = vmatpush1.bf16.msra.mxu0 %v432
        %455 = vmatprep.subr.bf16.mxu0 0
        %456 = vmatpush1.bf16.msra.mxu0 %v433
        %457 = vmatprep.subr.bf16.mxu0 0
        %458 = vmatpush1.bf16.msra.mxu0 %v434
        %459 = vmatprep.subr.bf16.mxu0 0
        %460 = vmatpush1.bf16.msra.mxu0 0
        %461 = vmatprep.subr.bf16.mxu0 0
        %462 = vmatpush1.bf16.msra.mxu0 0
        %463 = vmatprep.subr.bf16.mxu0 0
        %464 = vmatpush1.bf16.msra.mxu0 0
        %465 = vmatprep.subr.bf16.mxu0 0
        %466 = vmatpush1.bf16.msra.mxu0 0
        %467 = vmatprep.subr.bf16.mxu0 0
        %468 = vmatpush1.bf16.msra.mxu0 0
        %469 = vmatprep.subr.bf16.mxu0 0
        %470 = vmatpush1.bf16.msra.mxu0 0
        %471 = vmatprep.subr.bf16.mxu0 0
        %472 = vmatpush1.bf16.msra.mxu0 0
        %473 = vmatprep.subr.bf16.mxu0 0
        %474 = vmatpush1.bf16.msra.mxu0 0
        %475 = vmatprep.mubr.bf16.mxu0 0
        %476 = vmatmul.mubr.bf16.gmra.mrb[0].mxu0 %v371
        %v477 = vpop.f32.mrb[0].mxu0
        %v478 = vadd.f32 0.0, %v477
        %v479 = vpop.f32.mrb[0].mxu0
        %v480 = vpop.f32.mrb[0].mxu0
        %v481 = vadd.f32 0.0, %v480
        %v482 = vpop.f32.mrb[0].mxu0
        %483 = vmatprep.mubr.bf16.mxu0 0
        %484 = vmatmul.mubr.bf16.gmra.mrb[0].mxu0 %v372
        %v485 = vpop.f32.mrb[0].mxu0
        %v486 = vadd.f32 0.0, %v485
        %v487 = vpop.f32.mrb[0].mxu0
        %v488 = vpop.f32.mrb[0].mxu0
        %v489 = vadd.f32 0.0, %v488
        %v490 = vpop.f32.mrb[0].mxu0
        %491 = vmatprep.mubr.bf16.mxu0 0
        %492 = vmatmul.mubr.bf16.gmra.mrb[0].mxu0 %v373
        %v493 = vpop.f32.mrb[0].mxu0
        %v494 = vadd.f32 0.0, %v493
        %v495 = vpop.f32.mrb[0].mxu0
        %v496 = vpop.f32.mrb[0].mxu0
        %v497 = vadd.f32 0.0, %v496
        %v498 = vpop.f32.mrb[0].mxu0
        %499 = vmatprep.mubr.bf16.mxu0 0
        %500 = vmatmul.mubr.bf16.gmra.mrb[0].mxu0 %v374
        %v501 = vpop.f32.mrb[0].mxu0
        %v502 = vadd.f32 0.0, %v501
        %v503 = vpop.f32.mrb[0].mxu0
        %v504 = vpop.f32.mrb[0].mxu0
        %v505 = vadd.f32 0.0, %v504
        %v506 = vpop.f32.mrb[0].mxu0
        %507 = vmatprep.mubr.bf16.mxu0 0
        %508 = vmatmul.mubr.bf16.gmra.mrb[0].mxu0 %v375
        %v509 = vpop.f32.mrb[0].mxu0
        %v510 = vadd.f32 0.0, %v509
        %v511 = vpop.f32.mrb[0].mxu0
        %v512 = vpop.f32.mrb[0].mxu0
        %v513 = vadd.f32 0.0, %v512
        %v514 = vpop.f32.mrb[0].mxu0
        %515 = vmatprep.mubr.bf16.mxu0 0
        %516 = vmatmul.mubr.bf16.gmra.mrb[0].mxu0 %v376
        %v517 = vpop.f32.mrb[0].mxu0
        %v518 = vadd.f32 0.0, %v517
        %v519 = vpop.f32.mrb[0].mxu0
        %v520 = vpop.f32.mrb[0].mxu0
        %v521 = vadd.f32 0.0, %v520
        %v522 = vpop.f32.mrb[0].mxu0
        %523 = vmatprep.mubr.bf16.mxu0 0
        %524 = vmatmul.mubr.bf16.gmra.mrb[0].mxu0 %v377
        %v525 = vpop.f32.mrb[0].mxu0
        %v526 = vadd.f32 0.0, %v525
        %v527 = vpop.f32.mrb[0].mxu0
        %v528 = vpop.f32.mrb[0].mxu0
        %v529 = vadd.f32 0.0, %v528
        %v530 = vpop.f32.mrb[0].mxu0
        %531 = vmatprep.mubr.bf16.mxu0 0
        %532 = vmatmul.mubr.bf16.gmra.mrb[0].mxu0 %v378
        %v533 = vpop.f32.mrb[0].mxu0
        %v534 = vadd.f32 0.0, %v533
        %v535 = vpop.f32.mrb[0].mxu0
        %v536 = vpop.f32.mrb[0].mxu0
        %v537 = vadd.f32 0.0, %v536
        %v538 = vpop.f32.mrb[0].mxu0
        %539 = vdwg.mxu0
        %v540 = vadd.f32 %v379, %v478
        %v541 = vadd.f32 %v380, %v481
        %v542 = vadd.f32 %v381, %v486
        %v543 = vadd.f32 %v382, %v489
        %v544 = vadd.f32 %v383, %v494
        %v545 = vadd.f32 %v384, %v497
        %v546 = vadd.f32 %v385, %v502
        %v547 = vadd.f32 %v386, %v505
        %v548 = vadd.f32 %v387, %v510
        %v549 = vadd.f32 %v388, %v513
        %v550 = vadd.f32 %v389, %v518
        %v551 = vadd.f32 %v390, %v521
        %v552 = vadd.f32 %v391, %v526
        %v553 = vadd.f32 %v392, %v529
        %v554 = vadd.f32 %v393, %v534
        %v555 = vadd.f32 %v394, %v537
        %556 = vst [vmem:[#allocation2] sm:$0xff] %v540
        %557 = vst [vmem:[#allocation2 + $0x8] sm:$0xff] %v541
        %558 = vst [vmem:[#allocation2 + $0x10] sm:$0xff] %v542
        %559 = vst [vmem:[#allocation2 + $0x18] sm:$0xff] %v543
        %560 = vst [vmem:[#allocation2 + $0x20] sm:$0xff] %v544
        %561 = vst [vmem:[#allocation2 + $0x28] sm:$0xff] %v545
        %562 = vst [vmem:[#allocation2 + $0x30] sm:$0xff] %v546
        %563 = vst [vmem:[#allocation2 + $0x38] sm:$0xff] %v547
        %564 = vst [vmem:[#allocation2 + $0x40] sm:$0xff] %v548
        %565 = vst [vmem:[#allocation2 + $0x48] sm:$0xff] %v549
        %566 = vst [vmem:[#allocation2 + $0x50] sm:$0xff] %v550
        %567 = vst [vmem:[#allocation2 + $0x58] sm:$0xff] %v551
        %568 = vst [vmem:[#allocation2 + $0x60] sm:$0xff] %v552
        %569 = vst [vmem:[#allocation2 + $0x68] sm:$0xff] %v553
        %570 = vst [vmem:[#allocation2 + $0x70] sm:$0xff] %v554
        %571 = vst [vmem:[#allocation2 + $0x78] sm:$0xff] %v555
        %p572 = scmp.eq.s32.totalorder %s25, 2
        // Predicated region
        $region87: #{tpu_custom_call.1} parent=73 // pred_check
          %p573 = pneg %p572
        $region88: #{tpu_custom_call.1} parent=73 // pred_check_branch
          %575 = sbr.rel (%p573) target = $region90
        $region89: #{tpu_custom_call.1} parent=73 // pred_region
          %v576 = vld [vmem:[%s322] sm:$0xff]
          %v577 = vld [vmem:[%s322 + $0x8] sm:$0xff]
          %v578 = vld [vmem:[%s322 + $0x10] sm:$0xff]
          %v579 = vld [vmem:[%s322 + $0x18] sm:$0xff]
          %v580 = vld [vmem:[%s322 + $0x20] sm:$0xff]
          %v581 = vld [vmem:[%s322 + $0x28] sm:$0xff]
          %v582 = vld [vmem:[%s322 + $0x30] sm:$0xff]
          %v583 = vld [vmem:[%s322 + $0x38] sm:$0xff]
          %v584 = vld [vmem:[%s322 + $0x40] sm:$0xff]
          %v585 = vld [vmem:[%s322 + $0x48] sm:$0xff]
          %v586 = vld [vmem:[%s322 + $0x50] sm:$0xff]
          %v587 = vld [vmem:[%s322 + $0x58] sm:$0xff]
          %v588 = vld [vmem:[%s322 + $0x60] sm:$0xff]
          %v589 = vld [vmem:[%s322 + $0x68] sm:$0xff]
          %v590 = vld [vmem:[%s322 + $0x70] sm:$0xff]
          %v591 = vld [vmem:[%s322 + $0x78] sm:$0xff]
          %v592 = vld [vmem:[#allocation2] sm:$0xff]
          %v593 = vld [vmem:[#allocation2 + $0x8] sm:$0xff]
          %v594 = vld [vmem:[#allocation2 + $0x10] sm:$0xff]
          %v595 = vld [vmem:[#allocation2 + $0x18] sm:$0xff]
          %v596 = vld [vmem:[#allocation2 + $0x20] sm:$0xff]
          %v597 = vld [vmem:[#allocation2 + $0x28] sm:$0xff]
          %v598 = vld [vmem:[#allocation2 + $0x30] sm:$0xff]
          %v599 = vld [vmem:[#allocation2 + $0x38] sm:$0xff]
          %v600 = vld [vmem:[#allocation2 + $0x40] sm:$0xff]
          %v601 = vld [vmem:[#allocation2 + $0x48] sm:$0xff]
          %v602 = vld [vmem:[#allocation2 + $0x50] sm:$0xff]
          %v603 = vld [vmem:[#allocation2 + $0x58] sm:$0xff]
          %v604 = vld [vmem:[#allocation2 + $0x60] sm:$0xff]
          %v605 = vld [vmem:[#allocation2 + $0x68] sm:$0xff]
          %v606 = vld [vmem:[#allocation2 + $0x70] sm:$0xff]
          %v607 = vld [vmem:[#allocation2 + $0x78] sm:$0xff]
          %609 = vset.pattern.permute.xlu0 0
          %610 = vperm.xlu0 %609, %v576
          %v611 = vpop.permute.xlu0 %610
          %614 = vset.pattern.permute.xlu0 0
          %615 = vperm.xlu0 %614, %v577
          %v616 = vpop.permute.xlu0 %615
          %619 = vset.pattern.permute.xlu0 0
          %620 = vperm.xlu0 %619, %v578
          %v621 = vpop.permute.xlu0 %620
          %624 = vset.pattern.permute.xlu0 0
          %625 = vperm.xlu0 %624, %v579
          %v626 = vpop.permute.xlu0 %625
          %629 = vset.pattern.permute.xlu0 0
          %630 = vperm.xlu0 %629, %v580
          %v631 = vpop.permute.xlu0 %630
          %634 = vset.pattern.permute.xlu0 0
          %635 = vperm.xlu0 %634, %v581
          %v636 = vpop.permute.xlu0 %635
          %639 = vset.pattern.permute.xlu0 0
          %640 = vperm.xlu0 %639, %v582
          %v641 = vpop.permute.xlu0 %640
          %644 = vset.pattern.permute.xlu0 0
          %645 = vperm.xlu0 %644, %v583
          %v646 = vpop.permute.xlu0 %645
          %649 = vset.pattern.permute.xlu0 0
          %650 = vperm.xlu0 %649, %v584
          %v651 = vpop.permute.xlu0 %650
          %654 = vset.pattern.permute.xlu0 0
          %655 = vperm.xlu0 %654, %v585
          %v656 = vpop.permute.xlu0 %655
          %659 = vset.pattern.permute.xlu0 0
          %660 = vperm.xlu0 %659, %v586
          %v661 = vpop.permute.xlu0 %660
          %664 = vset.pattern.permute.xlu0 0
          %665 = vperm.xlu0 %664, %v587
          %v666 = vpop.permute.xlu0 %665
          %669 = vset.pattern.permute.xlu0 0
          %670 = vperm.xlu0 %669, %v588
          %v671 = vpop.permute.xlu0 %670
          %674 = vset.pattern.permute.xlu0 0
          %675 = vperm.xlu0 %674, %v589
          %v676 = vpop.permute.xlu0 %675
          %679 = vset.pattern.permute.xlu0 0
          %680 = vperm.xlu0 %679, %v590
          %v681 = vpop.permute.xlu0 %680
          %684 = vset.pattern.permute.xlu0 0
          %685 = vperm.xlu0 %684, %v591
          %v686 = vpop.permute.xlu0 %685
          %v688 = vmul.f32 %v592, %v611
          %v689 = vmul.f32 %v593, %v616
          %v690 = vmul.f32 %v594, %v621
          %v691 = vmul.f32 %v595, %v626
          %v692 = vmul.f32 %v596, %v631
          %v693 = vmul.f32 %v597, %v636
          %v694 = vmul.f32 %v598, %v641
          %v695 = vmul.f32 %v599, %v646
          %v696 = vmul.f32 %v600, %v651
          %v697 = vmul.f32 %v601, %v656
          %v698 = vmul.f32 %v602, %v661
          %v699 = vmul.f32 %v603, %v666
          %v700 = vmul.f32 %v604, %v671
          %v701 = vmul.f32 %v605, %v676
          %v702 = vmul.f32 %v606, %v681
          %v703 = vmul.f32 %v607, %v686
          %v704 = vpack.c.bf16 %v689, %v688
          %v705 = vpack.c.bf16 %v691, %v690
          %v706 = vpack.c.bf16 %v693, %v692
          %v707 = vpack.c.bf16 %v695, %v694
          %v708 = vpack.c.bf16 %v697, %v696
          %v709 = vpack.c.bf16 %v699, %v698
          %v710 = vpack.c.bf16 %v701, %v700
          %v711 = vpack.c.bf16 %v703, %v702
          %v712 = vld [vmem:[%s3] sm:$0xf]
          %v713 = vld [vmem:[%s3 + $0x4] sm:$0xf]
          %v714 = vld [vmem:[%s3 + $0x8] sm:$0xf]
          %v715 = vld [vmem:[%s3 + $0xc] sm:$0xf]
          %v716 = vld [vmem:[%s3 + $0x10] sm:$0xf]
          %v717 = vld [vmem:[%s3 + $0x14] sm:$0xf]
          %v718 = vld [vmem:[%s3 + $0x18] sm:$0xf]
          %v719 = vld [vmem:[%s3 + $0x1c] sm:$0xf]
          %v720 = vld [vmem:[%s3 + $0x20] sm:$0xf]
          %v721 = vld [vmem:[%s3 + $0x24] sm:$0xf]
          %v722 = vld [vmem:[%s3 + $0x28] sm:$0xf]
          %v723 = vld [vmem:[%s3 + $0x2c] sm:$0xf]
          %v724 = vld [vmem:[%s3 + $0x30] sm:$0xf]
          %v725 = vld [vmem:[%s3 + $0x34] sm:$0xf]
          %v726 = vld [vmem:[%s3 + $0x38] sm:$0xf]
          %v727 = vld [vmem:[%s3 + $0x3c] sm:$0xf]
          %v728 = vld [vmem:[%s4] sm:$0x1]
          %v730 = vlaneseq
          %v731 = vshrl.u32 %v730, 7
          %v732 = vsub.s32 0, %v731
          %v733 = vrot.slane %v728, %v732
          %v751 = vunpack.c.l.b16 %v712
          %v752 = vunpack.c.l.b16 %v713
          %v753 = vunpack.c.l.b16 %v714
          %v754 = vunpack.c.l.b16 %v715
          %v755 = vunpack.c.l.b16 %v716
          %v756 = vunpack.c.l.b16 %v717
          %v757 = vunpack.c.l.b16 %v718
          %v758 = vunpack.c.l.b16 %v719
          %v759 = vunpack.c.l.b16 %v720
          %v760 = vunpack.c.l.b16 %v721
          %v761 = vunpack.c.l.b16 %v722
          %v762 = vunpack.c.l.b16 %v723
          %v763 = vunpack.c.l.b16 %v724
          %v764 = vunpack.c.l.b16 %v725
          %v765 = vunpack.c.l.b16 %v726
          %v766 = vunpack.c.l.b16 %v727
          %v767 = vpack.c.b16 %v752, %v751
          %v768 = vpack.c.b16 %v754, %v753
          %v769 = vpack.c.b16 %v756, %v755
          %v770 = vpack.c.b16 %v758, %v757
          %v771 = vpack.c.b16 %v760, %v759
          %v772 = vpack.c.b16 %v762, %v761
          %v773 = vpack.c.b16 %v764, %v763
          %v774 = vpack.c.b16 %v766, %v765
          %783 = vmatprep.subr.bf16.mxu0 0
          %784 = vmatpush1.bf16.msra.mxu0 %v767
          %785 = vmatprep.subr.bf16.mxu0 0
          %786 = vmatpush1.bf16.msra.mxu0 %v768
          %787 = vmatprep.subr.bf16.mxu0 0
          %788 = vmatpush1.bf16.msra.mxu0 %v769
          %789 = vmatprep.subr.bf16.mxu0 0
          %790 = vmatpush1.bf16.msra.mxu0 %v770
          %791 = vmatprep.subr.bf16.mxu0 0
          %792 = vmatpush1.bf16.msra.mxu0 %v771
          %793 = vmatprep.subr.bf16.mxu0 0
          %794 = vmatpush1.bf16.msra.mxu0 %v772
          %795 = vmatprep.subr.bf16.mxu0 0
          %796 = vmatpush1.bf16.msra.mxu0 %v773
          %797 = vmatprep.subr.bf16.mxu0 0
          %798 = vmatpush1.bf16.msra.mxu0 %v774
          %799 = vmatprep.subr.bf16.mxu0 0
          %800 = vmatpush1.bf16.msra.mxu0 0
          %801 = vmatprep.subr.bf16.mxu0 0
          %802 = vmatpush1.bf16.msra.mxu0 0
          %803 = vmatprep.subr.bf16.mxu0 0
          %804 = vmatpush1.bf16.msra.mxu0 0
          %805 = vmatprep.subr.bf16.mxu0 0
          %806 = vmatpush1.bf16.msra.mxu0 0
          %807 = vmatprep.subr.bf16.mxu0 0
          %808 = vmatpush1.bf16.msra.mxu0 0
          %809 = vmatprep.subr.bf16.mxu0 0
          %810 = vmatpush1.bf16.msra.mxu0 0
          %811 = vmatprep.subr.bf16.mxu0 0
          %812 = vmatpush1.bf16.msra.mxu0 0
          %813 = vmatprep.subr.bf16.mxu0 0
          %814 = vmatpush1.bf16.msra.mxu0 0
          %815 = vmatprep.mubr.bf16.mxu0 0
          %816 = vmatmul.mubr.bf16.gmra.mrb[0].mxu0 %v704
          %v817 = vpop.f32.mrb[0].mxu0
          %v818 = vadd.f32 %v733, %v817
          %v819 = vpop.f32.mrb[0].mxu0
          %v820 = vpop.f32.mrb[0].mxu0
          %v821 = vadd.f32 %v733, %v820
          %v822 = vpop.f32.mrb[0].mxu0
          %823 = vmatprep.mubr.bf16.mxu0 0
          %824 = vmatmul.mubr.bf16.gmra.mrb[0].mxu0 %v705
          %v825 = vpop.f32.mrb[0].mxu0
          %v826 = vadd.f32 %v733, %v825
          %v827 = vpop.f32.mrb[0].mxu0
          %v828 = vpop.f32.mrb[0].mxu0
          %v829 = vadd.f32 %v733, %v828
          %v830 = vpop.f32.mrb[0].mxu0
          %831 = vmatprep.mubr.bf16.mxu0 0
          %832 = vmatmul.mubr.bf16.gmra.mrb[0].mxu0 %v706
          %v833 = vpop.f32.mrb[0].mxu0
          %v834 = vadd.f32 %v733, %v833
          %v835 = vpop.f32.mrb[0].mxu0
          %v836 = vpop.f32.mrb[0].mxu0
          %v837 = vadd.f32 %v733, %v836
          %v838 = vpop.f32.mrb[0].mxu0
          %839 = vmatprep.mubr.bf16.mxu0 0
          %840 = vmatmul.mubr.bf16.gmra.mrb[0].mxu0 %v707
          %v841 = vpop.f32.mrb[0].mxu0
          %v842 = vadd.f32 %v733, %v841
          %v843 = vpop.f32.mrb[0].mxu0
          %v844 = vpop.f32.mrb[0].mxu0
          %v845 = vadd.f32 %v733, %v844
          %v846 = vpop.f32.mrb[0].mxu0
          %847 = vmatprep.mubr.bf16.mxu0 0
          %848 = vmatmul.mubr.bf16.gmra.mrb[0].mxu0 %v708
          %v849 = vpop.f32.mrb[0].mxu0
          %v850 = vadd.f32 %v733, %v849
          %v851 = vpop.f32.mrb[0].mxu0
          %v852 = vpop.f32.mrb[0].mxu0
          %v853 = vadd.f32 %v733, %v852
          %v854 = vpop.f32.mrb[0].mxu0
          %855 = vmatprep.mubr.bf16.mxu0 0
          %856 = vmatmul.mubr.bf16.gmra.mrb[0].mxu0 %v709
          %v857 = vpop.f32.mrb[0].mxu0
          %v858 = vadd.f32 %v733, %v857
          %v859 = vpop.f32.mrb[0].mxu0
          %v860 = vpop.f32.mrb[0].mxu0
          %v861 = vadd.f32 %v733, %v860
          %v862 = vpop.f32.mrb[0].mxu0
          %863 = vmatprep.mubr.bf16.mxu0 0
          %864 = vmatmul.mubr.bf16.gmra.mrb[0].mxu0 %v710
          %v865 = vpop.f32.mrb[0].mxu0
          %v866 = vadd.f32 %v733, %v865
          %v867 = vpop.f32.mrb[0].mxu0
          %v868 = vpop.f32.mrb[0].mxu0
          %v869 = vadd.f32 %v733, %v868
          %v870 = vpop.f32.mrb[0].mxu0
          %871 = vmatprep.mubr.bf16.mxu0 0
          %872 = vmatmul.mubr.bf16.gmra.mrb[0].mxu0 %v711
          %v873 = vpop.f32.mrb[0].mxu0
          %v874 = vadd.f32 %v733, %v873
          %v875 = vpop.f32.mrb[0].mxu0
          %v876 = vpop.f32.mrb[0].mxu0
          %v877 = vadd.f32 %v733, %v876
          %v878 = vpop.f32.mrb[0].mxu0
          %879 = vdwg.mxu0
          %v880 = vmax.f32 %v818, 0.0
          %v881 = vmax.f32 %v821, 0.0
          %v882 = vmax.f32 %v826, 0.0
          %v883 = vmax.f32 %v829, 0.0
          %v884 = vmax.f32 %v834, 0.0
          %v885 = vmax.f32 %v837, 0.0
          %v886 = vmax.f32 %v842, 0.0
          %v887 = vmax.f32 %v845, 0.0
          %v888 = vmax.f32 %v850, 0.0
          %v889 = vmax.f32 %v853, 0.0
          %v890 = vmax.f32 %v858, 0.0
          %v891 = vmax.f32 %v861, 0.0
          %v892 = vmax.f32 %v866, 0.0
          %v893 = vmax.f32 %v869, 0.0
          %v894 = vmax.f32 %v874, 0.0
          %v895 = vmax.f32 %v877, 0.0
          %v896 = vmul.f32 %v880, %v611
          %v897 = vmul.f32 %v881, %v616
          %v898 = vmul.f32 %v882, %v621
          %v899 = vmul.f32 %v883, %v626
          %v900 = vmul.f32 %v884, %v631
          %v901 = vmul.f32 %v885, %v636
          %v902 = vmul.f32 %v886, %v641
          %v903 = vmul.f32 %v887, %v646
          %v904 = vmul.f32 %v888, %v651
          %v905 = vmul.f32 %v889, %v656
          %v906 = vmul.f32 %v890, %v661
          %v907 = vmul.f32 %v891, %v666
          %v908 = vmul.f32 %v892, %v671
          %v909 = vmul.f32 %v893, %v676
          %v910 = vmul.f32 %v894, %v681
          %v911 = vmul.f32 %v895, %v686
          %v912 = vpack.c.bf16 %v897, %v896
          %v913 = vpack.c.bf16 %v899, %v898
          %v914 = vpack.c.bf16 %v901, %v900
          %v915 = vpack.c.bf16 %v903, %v902
          %v916 = vpack.c.bf16 %v905, %v904
          %v917 = vpack.c.bf16 %v907, %v906
          %v918 = vpack.c.bf16 %v909, %v908
          %v919 = vpack.c.bf16 %v911, %v910
          %v928 = vunpack.c.l.b16 %v912
          %v929 = vunpack.c.h.b16 %v912
          %v930 = vunpack.c.l.b16 %v913
          %v931 = vunpack.c.h.b16 %v913
          %v932 = vunpack.c.l.b16 %v914
          %v933 = vunpack.c.h.b16 %v914
          %v934 = vunpack.c.l.b16 %v915
          %v935 = vunpack.c.h.b16 %v915
          %v936 = vunpack.c.l.b16 %v916
          %v937 = vunpack.c.h.b16 %v916
          %v938 = vunpack.c.l.b16 %v917
          %v939 = vunpack.c.h.b16 %v917
          %v940 = vunpack.c.l.b16 %v918
          %v941 = vunpack.c.h.b16 %v918
          %v942 = vunpack.c.l.b16 %v919
          %v943 = vunpack.c.h.b16 %v919
          %v944 = vpack.c.b16 %v928, %v928
          %v945 = vpack.c.b16 %v929, %v929
          %v946 = vpack.c.b16 %v930, %v930
          %v947 = vpack.c.b16 %v931, %v931
          %v948 = vpack.c.b16 %v932, %v932
          %v949 = vpack.c.b16 %v933, %v933
          %v950 = vpack.c.b16 %v934, %v934
          %v951 = vpack.c.b16 %v935, %v935
          %v952 = vpack.c.b16 %v936, %v936
          %v953 = vpack.c.b16 %v937, %v937
          %v954 = vpack.c.b16 %v938, %v938
          %v955 = vpack.c.b16 %v939, %v939
          %v956 = vpack.c.b16 %v940, %v940
          %v957 = vpack.c.b16 %v941, %v941
          %v958 = vpack.c.b16 %v942, %v942
          %v959 = vpack.c.b16 %v943, %v943
          %976 = vst [vmem:[%s316] sm:$0xf] %v944
          %977 = vst [vmem:[%s316 + $0x4] sm:$0xf] %v945
          %978 = vst [vmem:[%s316 + $0x8] sm:$0xf] %v946
          %979 = vst [vmem:[%s316 + $0xc] sm:$0xf] %v947
          %980 = vst [vmem:[%s316 + $0x10] sm:$0xf] %v948
          %981 = vst [vmem:[%s316 + $0x14] sm:$0xf] %v949
          %982 = vst [vmem:[%s316 + $0x18] sm:$0xf] %v950
          %983 = vst [vmem:[%s316 + $0x1c] sm:$0xf] %v951
          %984 = vst [vmem:[%s316 + $0x20] sm:$0xf] %v952
          %985 = vst [vmem:[%s316 + $0x24] sm:$0xf] %v953
          %986 = vst [vmem:[%s316 + $0x28] sm:$0xf] %v954
          %987 = vst [vmem:[%s316 + $0x2c] sm:$0xf] %v955
          %988 = vst [vmem:[%s316 + $0x30] sm:$0xf] %v956
          %989 = vst [vmem:[%s316 + $0x34] sm:$0xf] %v957
          %990 = vst [vmem:[%s316 + $0x38] sm:$0xf] %v958
          %991 = vst [vmem:[%s316 + $0x3c] sm:$0xf] %v959
        $region90: #{tpu_custom_call.1} parent=73 // pred_fallthru
          _
        %s992 = sand.u32 %s157, 1
        %s993 = scalar_lea.sflag [#allocation6], %s992
        %s994 = sand.u32 %s157, 1
        %s995 = smul.addr %s994, 64
        %s996 = scalar_lea.vmem [#allocation7], %s995
        // Predicated region
        $region91: #{tpu_custom_call.1} parent=73 // pred_check
          %p997 = pneg %p167
        $region92: #{tpu_custom_call.1} parent=73 // pred_check_branch
          %999 = sbr.rel (%p997) target = $region94
        $region93: #{tpu_custom_call.1} parent=73 // pred_region
          %s1000 = smul.u32 16, %s24
          %s1002 = ssub.s32 1024, 1024
          %1003 = vsyncadd %s993, %s1002
          %s1004 = smul.addr %s1000, 64
          %s1005 = scalar_lea.hbm %s5, %s1004
          %s1006 = sshll.u32 %s996, 4
          %s1007 = int_to_ptr.vmem [resolvable:$true] %s1006
          %1012 = dma.vmem_to_hbm [thread:$0]  %s1007, 1024, %s1005, %s993, 64, 64, 4
        $region94: #{tpu_custom_call.1} parent=73 // pred_fallthru
          _
      $region74: #{tpu_custom_call.1} parent=5 // pred_fallthru
        _
      %p1013 = scmp.le.s32.totalorder 2, %s15
      // Predicated region
      $region95: #{tpu_custom_call.1} parent=5 // pred_check
        %p1014 = pneg %p1013
      $region96: #{tpu_custom_call.1} parent=5 // pred_check_branch
        %1016 = sbr.rel (%p1014) target = $region98
      $region97: #{tpu_custom_call.1} parent=5 // pred_region
        %s1017 = ssub.s32 %s15, 2
        // Predicated region
        $region99: #{tpu_custom_call.1} parent=97 // pred_check
          %p1018 = pneg %p173
        $region100: #{tpu_custom_call.1} parent=97 // pred_check_branch
          %1020 = sbr.rel (%p1018) target = $region102
        $region101: #{tpu_custom_call.1} parent=97 // pred_region
          %s1021 = sand.u32 %s158, 1
          %s1022 = scalar_lea.sflag [#allocation6], %s1021
          %s1023 = sand.u32 %s158, 1
          %s1024 = smul.addr %s1023, 64
          %s1025 = scalar_lea.vmem [#allocation7], %s1024
          %1026 = dma.done %s1022, 1024
        $region102: #{tpu_custom_call.1} parent=97 // pred_fallthru
          _
      $region98: #{tpu_custom_call.1} parent=5 // pred_fallthru
        _
    $region6: #{tpu_custom_call.1} parent=1 // loop_footer
      %s19 = sadd.s32 1, %s15
    $region7: #{tpu_custom_call.1} parent=1 // loop_footer_branch
      %14 = sbr.rel target = $region3
    $region8: #{tpu_custom_call.1} parent=1 // loop_exit
      _
    %1027 = vsyncpa [#allocation5], 1
    %s1028 = scalar_lea.sflag [#allocation5], 1
    %1029 = vsyncpa %s1028, 1
    %1030 = vsyncpa [#allocation6], 1
    %s1031 = scalar_lea.sflag [#allocation6], 1
    %1032 = vsyncpa %s1031, 1

</llo_original>
